<compile_context>
chip_gen: v7x
topology: tpu7x:2x2x1
jax: 0.10.0
libtpu: 0.0.40
codegen_flags: <defaults>
</compile_context>

<pallas_src>
import functools

import jax
import jax.numpy as jnp
from jax.experimental import pallas as pl
from jax.experimental.pallas import tpu as pltpu


def _round_up(x, m):
    return ((x + m - 1) // m) * m


def _prob_to_u32_threshold(q):
    """keep iff bits >= threshold  <=>  U[0,1) >= q."""
    t = int(round(q * 4294967296.0))
    return max(0, min(t, 4294967295))


def _tile_random_bits(seed, row0, col0, shape, salt):
    """Counter-based uint32 hash -> uniform bits per (global row, global col).

    Trimmed per perf review (~8 u32 VPU ops/elem) — plenty of mixing for
    dropout masks, and it lowers on Mosaic and in interpret mode alike.
    """
    rows = (jax.lax.broadcasted_iota(jnp.int32, shape, 0) + row0).astype(jnp.uint32)
    cols = (jax.lax.broadcasted_iota(jnp.int32, shape, 1) + col0).astype(jnp.uint32)
    key = seed.astype(jnp.uint32) + jnp.uint32(salt)
    x = (rows * jnp.uint32(0x9E3779B1)) ^ (cols * jnp.uint32(0x85EBCA77)) ^ key
    x = x ^ (x >> 16)
    x = x * jnp.uint32(0x7FEB352D)
    x = x ^ (x >> 15)
    return x


def _hop_kernel(seed_ref, adj_ref, x_ref, out_ref, acc_ref, *,
                tm, tk, d_pad, quantized,
                edge_dropout, edge_rate, mess_dropout, mess_rate):
    i = pl.program_id(0)          # output row tile ("parallel")
    k = pl.program_id(1)          # reduction tile (innermost, "arbitrary")
    nk = pl.num_programs(1)

    adj_tile = adj_ref[...]
    if quantized:
        # int8 storage halves/quarters HBM traffic; MXU runs bf16 x bf16 -> f32.
        # The dequant scale is applied to the f32 result outside the kernel
        # (dropout is multiplicative/zeroing, so that is exact).
        adj_tile = adj_tile.astype(jnp.bfloat16)

    if edge_dropout:
        # Reference (_sparse_dropout) semantics: keep an edge with probability
        # `edge_rate` (floor(rate + U)), rescale kept edges by 1/(1 - rate).
        bits = _tile_random_bits(seed_ref[0], i * tm, k * tk, (tm, tk),
                                 salt=0x243F6A88)
        keep = bits >= jnp.uint32(_prob_to_u32_threshold(1.0 - edge_rate))
        adj_tile = jnp.where(keep, adj_tile, jnp.zeros_like(adj_tile))

    x = x_ref[...].astype(adj_tile.dtype)
    part = jnp.dot(adj_tile, x, preferred_element_type=jnp.float32)

    @pl.when(k == 0)
    def _():
        acc_ref[...] = part          # write first partial directly, no zero pass

    @pl.when(k != 0)
    def _():
        acc_ref[...] += part

    @pl.when(k == nk - 1)
    def _():
        val = acc_ref[...]
        if edge_dropout:
            val = val * (1.0 / (1.0 - edge_rate))
        if mess_dropout:
            # nn.Dropout(p): drop with prob p, scale kept values by 1/(1-p).
            bits = _tile_random_bits(seed_ref[1], i * tm, 0, (tm, d_pad),
                                     salt=0x85A308D3)
            keep = bits >= jnp.uint32(_prob_to_u32_threshold(mess_rate))
            val = jnp.where(keep, val * (1.0 / (1.0 - mess_rate)),
                            jnp.zeros_like(val))
        out_ref[...] = val.astype(out_ref.dtype)


def _vmem_capacity_bytes():
    try:
        info = pltpu.get_tpu_info()
        cap = getattr(info, "vmem_capacity_bytes", None)
        if cap:
            return int(cap)
    except Exception:
        pass
    return 64 * 1024 * 1024          # conservative (v7x physical VMEM)


def graph_conv_forward(user_embed, item_embed, interact_mat, *, n_users, n_hops,
                       edge_dropout_rate=0.5, mess_dropout_rate=0.1,
                       mess_dropout=True, edge_dropout=True, rng_key=None,
                       compute_dtype=jnp.bfloat16, max_tile=1024):
    """Pallas implementation of GraphConv.forward (interact_mat passed dense).

    compute_dtype: adjacency storage/streaming dtype.  jnp.int8 quantizes the
    adjacency (single scale, dequantized on the f32 hop result); float dtypes
    are streamed as-is.  HBM traffic is dominated by n_hops * N^2 * itemsize.
    """
    all_embed = jnp.concatenate([user_embed, item_embed], axis=0)   # (N, D)
    N, D = all_embed.shape
    out_dtype = all_embed.dtype

    d_pad = _round_up(D, 128)                      # lane-dense, full MXU width
    t = min(_round_up(max_tile, 128), _round_up(N, 128))
    n_pad = _round_up(N, t)

    emb_pad = jnp.zeros((n_pad, d_pad), out_dtype).at[:N, :D].set(all_embed)

    quantized = bool(jnp.issubdtype(jnp.dtype(compute_dtype), jnp.integer))
    if quantized:
        maxabs = jnp.max(jnp.abs(interact_mat)).astype(jnp.float32)
        scale = jnp.maximum(maxabs, jnp.float32(1e-30)) / 127.0
        adj_q = jnp.clip(jnp.round(interact_mat / scale), -127, 127)
        adj_pad = (jnp.zeros((n_pad, n_pad), compute_dtype)
                   .at[:N, :N].set(adj_q.astype(compute_dtype)))
    else:
        scale = None
        if (interact_mat.shape == (n_pad, n_pad)
                and interact_mat.dtype == jnp.dtype(compute_dtype)):
            adj_pad = interact_mat                 # accept pre-padded adjacency
        else:
            adj_pad = (jnp.zeros((n_pad, n_pad), compute_dtype)
                       .at[:N, :N].set(interact_mat.astype(compute_dtype)))

    if rng_key is None:
        rng_key = jax.random.PRNGKey(0)

    kernel = functools.partial(
        _hop_kernel, tm=t, tk=t, d_pad=d_pad, quantized=quantized,
        edge_dropout=bool(edge_dropout), edge_rate=float(edge_dropout_rate),
        mess_dropout=bool(mess_dropout), mess_rate=float(mess_dropout_rate))

    adj_bytes = jnp.dtype(compute_dtype).itemsize
    agg_bytes = jnp.dtype(out_dtype).itemsize
    vmem_needed = (2 * t * t * adj_bytes           # adjacency tile (double-buffered)
                   + 2 * t * d_pad * agg_bytes     # prev-hop aggregate tile
                   + 2 * t * d_pad * agg_bytes     # output tile
                   + t * d_pad * 4)                # f32 accumulator scratch
    vmem_limit = int(min(vmem_needed + (8 << 20),
                         _vmem_capacity_bytes() - (8 << 20)))
    vmem_limit = max(vmem_limit, 16 << 20)

    hop_fn = pl.pallas_call(
        kernel,
        out_shape=jax.ShapeDtypeStruct((n_pad, d_pad), out_dtype),
        grid_spec=pltpu.PrefetchScalarGridSpec(
            num_scalar_prefetch=1,                 # [edge_seed, mess_seed]
            grid=(n_pad // t, n_pad // t),
            in_specs=[
                pl.BlockSpec((t, t), lambda i, k, s: (i, k)),       # adjacency
                pl.BlockSpec((t, d_pad), lambda i, k, s: (k, 0)),   # prev hop agg
            ],
            out_specs=pl.BlockSpec((t, d_pad), lambda i, k, s: (i, 0)),
            scratch_shapes=[pltpu.VMEM((t, d_pad), jnp.float32)],   # k-accumulator
        ),
        compiler_params=pltpu.CompilerParams(
            dimension_semantics=("parallel", "arbitrary"),
            vmem_limit_bytes=vmem_limit),
    )

    embs = [emb_pad]                               # hop 0 := all_embed
    agg = emb_pad
    for hop in range(n_hops):
        hop_key = jax.random.fold_in(rng_key, hop)
        seeds = jax.random.randint(hop_key, (2,), 0, jnp.iinfo(jnp.int32).max,
                                   dtype=jnp.int32)
        agg = hop_fn(seeds, adj_pad, agg)
        if quantized:
            # Dequantize outside the kernel (exact: dropout is multiplicative).
            agg = (agg * scale).astype(out_dtype)
        embs.append(agg)

    stacked = jnp.stack(embs, axis=1)[:N, :, :D]   # (N, n_hops+1, D)
    return stacked[:n_users], stacked[n_users:]


def _reference_eval(user_embed, item_embed, interact_mat, n_users, n_hops):
    """Pure-JAX reference for mess_dropout=False, edge_dropout=False."""
    all_embed = jnp.concatenate([user_embed, item_embed], axis=0)
    agg = all_embed
    embs = [all_embed]
    for _ in range(n_hops):
        agg = jnp.matmul(interact_mat, agg, precision=jax.lax.Precision.HIGHEST)
        embs.append(agg)
    embs = jnp.stack(embs, axis=1)
    return embs[:n_users], embs[n_users:]


if __name__ == "__main__":
    n_users, n_items, D, n_hops = 8, 8, 32, 3
    N = n_users + n_items

    key = jax.random.PRNGKey(0)
    k_r, k_u, k_i = jax.random.split(key, 3)

    # Deterministic synthetic bipartite graph, symmetrically-normalized
    # adjacency [[0, R], [R^T, 0]] (the usual LightGCN interact_mat).
    R = (jax.random.uniform(k_r, (n_users, n_items)) < 0.4).astype(jnp.float32)
    A = jnp.zeros((N, N), jnp.float32)
    A = A.at[:n_users, n_users:].set(R)
    A = A.at[n_users:, :n_users].set(R.T)
    deg = jnp.maximum(A.sum(axis=1), 1.0)
    d_inv_sqrt = 1.0 / jnp.sqrt(deg)
    interact_mat = A * d_inv_sqrt[:, None] * d_inv_sqrt[None, :]

    user_embed = jax.random.normal(k_u, (n_users, D), jnp.float32)
    item_embed = jax.random.normal(k_i, (n_items, D), jnp.float32)

    # Eval mode (no dropouts), f32 adjacency — check against pure-JAX reference.
    u_out, i_out = graph_conv_forward(
        user_embed, item_embed, interact_mat,
        n_users=n_users, n_hops=n_hops,
        mess_dropout=False, edge_dropout=False,
        compute_dtype=jnp.float32)
    jax.block_until_ready((u_out, i_out))

    u_ref, i_ref = _reference_eval(user_embed, item_embed, interact_mat,
                                   n_users, n_hops)
    assert u_out.shape == (n_users, n_hops + 1, D)
    assert i_out.shape == (n_items, n_hops + 1, D)
    assert jnp.allclose(u_out[:, 0, :], user_embed)          # hop-0 passthrough
    assert jnp.allclose(i_out[:, 0, :], item_embed)
    assert jnp.allclose(u_out, u_ref, atol=2e-2, rtol=2e-2)
    assert jnp.allclose(i_out, i_ref, atol=2e-2, rtol=2e-2)

    # Train mode (edge + message dropout) with int8-quantized adjacency stream —
    # exercises the dropout masks and the dequant path.
    u_tr, i_tr = graph_conv_forward(
        user_embed, item_embed, interact_mat,
        n_users=n_users, n_hops=n_hops,
        mess_dropout=True, edge_dropout=True,
        rng_key=jax.random.PRNGKey(42),
        compute_dtype=jnp.int8)
    jax.block_until_ready((u_tr, i_tr))
    assert u_tr.shape == (n_users, n_hops + 1, D)
    assert i_tr.shape == (n_items, n_hops + 1, D)
    assert bool(jnp.isfinite(u_tr).all()) and bool(jnp.isfinite(i_tr).all())

    print("KERNEL_OK")
</pallas_src>

<mosaic_0001>
module attributes {stable_mosaic.version = 11 : i64} {
  func.func @_hop_kernel(%arg0: i32, %arg1: i32, %arg2: memref<2xi32, #tpu.memory_space<smem>>, %arg3: memref<128x128xf32, #tpu.memory_space<vmem>>, %arg4: memref<128x128xf32, #tpu.memory_space<vmem>>, %arg5: memref<128x128xf32, #tpu.memory_space<vmem>>, %arg6: memref<128x128xf32, #tpu.memory_space<vmem>>) attributes {dimension_semantics = [#tpu.dimension_semantics<parallel>, #tpu.dimension_semantics<arbitrary>], iteration_bounds = array<i64: 1, 1>, scalar_prefetch = 1 : i64, scratch_operands = 1 : i64, tpu.core_type = #tpu.core_type<tc>, window_params = [{transform_indices = @transform_0, window_bounds = array<i64: 128, 128>}, {transform_indices = @transform_1, window_bounds = array<i64: 128, 128>}, {transform_indices = @transform_2, window_bounds = array<i64: 128, 128>}]} {
    %c0 = arith.constant 0 : index
    %c0_0 = arith.constant 0 : index
    %0 = vector.load %arg3[%c0, %c0_0] : memref<128x128xf32, #tpu.memory_space<vmem>>, vector<128x128xf32>
    %c0_1 = arith.constant 0 : index
    %c0_2 = arith.constant 0 : index
    %1 = vector.load %arg4[%c0_1, %c0_2] : memref<128x128xf32, #tpu.memory_space<vmem>>, vector<128x128xf32>
    %cst = arith.constant dense<0.000000e+00> : vector<128x128xf32>
    %2 = tpu.matmul %0, %1, %cst {dimension_numbers = #tpu.dot_dimension_numbers<[1], [0], [0], [1], [0, 0, 1, 1], [], []>} : vector<128x128xf32>, vector<128x128xf32>, vector<128x128xf32> -> vector<128x128xf32>
    %c0_i32 = arith.constant 0 : i32
    %3 = arith.cmpi eq, %arg1, %c0_i32 : i32
    %4 = arith.extui %3 : i1 to i32
    %c0_i32_3 = arith.constant 0 : i32
    %5 = arith.cmpi ne, %4, %c0_i32_3 : i32
    scf.if %5 {
      %c0_8 = arith.constant 0 : index
      %c0_9 = arith.constant 0 : index
      %12 = vector.load %arg6[%c0_8, %c0_9] : memref<128x128xf32, #tpu.memory_space<vmem>>, vector<128x128xf32>
      tpu.vector_store %arg6[%c0_8, %c0_9], %2 {strides = array<i32>} : memref<128x128xf32, #tpu.memory_space<vmem>>, vector<128x128xf32>,
    } else {
    }
    %c0_i32_4 = arith.constant 0 : i32
    %6 = arith.cmpi ne, %arg1, %c0_i32_4 : i32
    %7 = arith.extui %6 : i1 to i32
    %c0_i32_5 = arith.constant 0 : i32
    %8 = arith.cmpi ne, %7, %c0_i32_5 : i32
    scf.if %8 {
      %c0_8 = arith.constant 0 : index
      %c0_9 = arith.constant 0 : index
      %12 = vector.load %arg6[%c0_8, %c0_9] : memref<128x128xf32, #tpu.memory_space<vmem>>, vector<128x128xf32>
      %13 = arith.addf %12, %2 : vector<128x128xf32>
      %c0_10 = arith.constant 0 : index
      %c0_11 = arith.constant 0 : index
      %14 = vector.load %arg6[%c0_10, %c0_11] : memref<128x128xf32, #tpu.memory_space<vmem>>, vector<128x128xf32>
      tpu.vector_store %arg6[%c0_10, %c0_11], %13 {strides = array<i32>} : memref<128x128xf32, #tpu.memory_space<vmem>>, vector<128x128xf32>,
    } else {
    }
    %c0_i32_6 = arith.constant 0 : i32
    %9 = arith.cmpi eq, %arg1, %c0_i32_6 : i32
    %10 = arith.extui %9 : i1 to i32
    %c0_i32_7 = arith.constant 0 : i32
    %11 = arith.cmpi ne, %10, %c0_i32_7 : i32
    scf.if %11 {
      %c0_8 = arith.constant 0 : index
      %c0_9 = arith.constant 0 : index
      %12 = vector.load %arg6[%c0_8, %c0_9] : memref<128x128xf32, #tpu.memory_space<vmem>>, vector<128x128xf32>
      %c0_10 = arith.constant 0 : index
      %c0_11 = arith.constant 0 : index
      %13 = vector.load %arg5[%c0_10, %c0_11] : memref<128x128xf32, #tpu.memory_space<vmem>>, vector<128x128xf32>
      tpu.vector_store %arg5[%c0_10, %c0_11], %12 {strides = array<i32>} : memref<128x128xf32, #tpu.memory_space<vmem>>, vector<128x128xf32>,
    } else {
    }
    return
  }
  func.func @transform_0(%arg0: i32, %arg1: i32, %arg2: memref<2xi32, #tpu.memory_space<smem>>) -> (i32, i32) {
    %c0_i32 = arith.constant 0 : i32
    return %arg0, %arg1 : i32, i32
  }
  func.func @transform_1(%arg0: i32, %arg1: i32, %arg2: memref<2xi32, #tpu.memory_space<smem>>) -> (i32, i32) {
    %c0_i32 = arith.constant 0 : i32
    %c0_i32_0 = arith.constant 0 : i32
    return %arg1, %c0_i32 : i32, i32
  }
  func.func @transform_2(%arg0: i32, %arg1: i32, %arg2: memref<2xi32, #tpu.memory_space<smem>>) -> (i32, i32) {
    %c0_i32 = arith.constant 0 : i32
    %c0_i32_0 = arith.constant 0 : i32
    return %arg0, %c0_i32 : i32, i32
  }
}

</mosaic_0001>

<llo_original>
// kernel: tpu_custom_call.1
$region0: #{tpu_custom_call.1}
  #allocation0 [shape = 'u32[]', space=smem, size = 0x4, offset = 0x4, fixed_abs, tag = 'smem constant byte address 0x4 - core index']
  #allocation1 [shape = 'u32[144,128]{1,0:T(1,128)}', space=vmem, size = 0x12000, scoped, tag = 'internal scratch']
  #allocation2 [shape = 'f32[128,128]{1,0:T(8,128)}', space=vmem, size = 0x10000, scoped, tag = 'scratch operand']
  #allocation3 [shape = 's32[1]{0}', space=sflag, size = 0x4, scoped, tag = 'scoped memory for tpu_custom_call.1']
  #allocation4 [shape = 'u8[512]{0}', space=smem, size = 0x200, scoped, tag = 'prefetched SMEM operand 0']
  %s0 = inlined_call_operand.hbm [shape: s32[2], index: 0, kind: input, shape index: {}]
  %s1 = inlined_call_operand.hbm [shape: f32[128,128], index: 1, kind: input, shape index: {}]
  %s2 = inlined_call_operand.hbm [shape: f32[128,128], index: 2, kind: input, shape index: {}]
  %s3 = inlined_call_operand.hbm [shape: f32[128,128], index: 3, kind: output, shape index: {}]
  %s4 = sld [smem:[#allocation0]]
  $region38: #{tpu_custom_call.1} parent=0
    _
  %s6 = ssub.s32 1, %s4
  %s7 = scalar_select 0, %s6, %s4
  %9 = dma.hbm_to_smem %s0, 16, [#allocation4], [#allocation3]
  %10 = dma.done [#allocation3], 16
  %11 = sfence
  $region1: #{tpu_custom_call.1} parent=0
    #allocation5 [shape = 'u8[65536]{0}', space=vmem, size = 0x10000, scoped, tag = 'input window, operand 1, single buffered']
    #allocation6 [shape = 's32[1]{0}', space=sflag, size = 0x4, scoped, tag = 'scoped memory for tpu_custom_call.1']
    #allocation7 [shape = 's32[1]{0}', space=sflag, size = 0x4, scoped, tag = 'scoped memory for tpu_custom_call.1']
    #allocation8 [shape = 'u8[65536]{0}', space=vmem, size = 0x10000, scoped, tag = 'input window, operand 2, single buffered']
    #allocation9 [shape = 's32[1]{0}', space=sflag, size = 0x4, scoped, tag = 'scoped memory for tpu_custom_call.1']
    #allocation10 [shape = 'u8[65536]{0}', space=vmem, size = 0x10000, scoped, tag = 'output window, operand 0, single buffered']
    %12 = vsyncpa [#allocation6], 0
    %13 = vsyncpa [#allocation9], 0
    %14 = vsyncpa [#allocation7], 0
    // Predicated region
    $region2: #{tpu_custom_call.1} parent=1 // pred_check
      _
    $region3: #{tpu_custom_call.1} parent=1 // pred_check_branch
      %16 = sbr.rel (0) target = $region5
    $region4: #{tpu_custom_call.1} parent=1 // pred_region
      %s18 = ssub.s32 2048, 2048
      %19 = vsyncadd [#allocation6], %s18
      %s20 = sshll.u32 [#allocation5], 4
      %s21 = int_to_ptr.vmem [resolvable:$true] %s20
      %26 = dma.hbm_to_vmem [thread:$0]  %s1, 2048, %s21, [#allocation6], 128, 128, 8
    $region5: #{tpu_custom_call.1} parent=1 // pred_fallthru
      _
    // Predicated region
    $region6: #{tpu_custom_call.1} parent=1 // pred_check
      _
    $region7: #{tpu_custom_call.1} parent=1 // pred_check_branch
      %28 = sbr.rel (0) target = $region9
    $region8: #{tpu_custom_call.1} parent=1 // pred_region
      %s30 = ssub.s32 2048, 2048
      %31 = vsyncadd [#allocation9], %s30
      %s32 = sshll.u32 [#allocation8], 4
      %s33 = int_to_ptr.vmem [resolvable:$true] %s32
      %38 = dma.hbm_to_vmem [thread:$0]  %s2, 2048, %s33, [#allocation9], 128, 128, 8
    $region9: #{tpu_custom_call.1} parent=1 // pred_fallthru
      _
    // Predicated region
    $region10: #{tpu_custom_call.1} parent=1 // pred_check
      _
    $region11: #{tpu_custom_call.1} parent=1 // pred_check_branch
      %40 = sbr.rel (0) target = $region13
    $region12: #{tpu_custom_call.1} parent=1 // pred_region
      %41 = dma.done [#allocation6], 2048
    $region13: #{tpu_custom_call.1} parent=1 // pred_fallthru
      _
    // Predicated region
    $region14: #{tpu_custom_call.1} parent=1 // pred_check
      _
    $region15: #{tpu_custom_call.1} parent=1 // pred_check_branch
      %43 = sbr.rel (0) target = $region17
    $region16: #{tpu_custom_call.1} parent=1 // pred_region
      %44 = dma.done [#allocation9], 2048
    $region17: #{tpu_custom_call.1} parent=1 // pred_fallthru
      _
    %v45 = vld [vmem:[#allocation5] sm:$0xff]
    %v46 = vld [vmem:[#allocation5 + $0x8] sm:$0xff]
    %v47 = vld [vmem:[#allocation5 + $0x10] sm:$0xff]
    %v48 = vld [vmem:[#allocation5 + $0x18] sm:$0xff]
    %v49 = vld [vmem:[#allocation5 + $0x20] sm:$0xff]
    %v50 = vld [vmem:[#allocation5 + $0x28] sm:$0xff]
    %v51 = vld [vmem:[#allocation5 + $0x30] sm:$0xff]
    %v52 = vld [vmem:[#allocation5 + $0x38] sm:$0xff]
    %v53 = vld [vmem:[#allocation5 + $0x40] sm:$0xff]
    %v54 = vld [vmem:[#allocation5 + $0x48] sm:$0xff]
    %v55 = vld [vmem:[#allocation5 + $0x50] sm:$0xff]
    %v56 = vld [vmem:[#allocation5 + $0x58] sm:$0xff]
    %v57 = vld [vmem:[#allocation5 + $0x60] sm:$0xff]
    %v58 = vld [vmem:[#allocation5 + $0x68] sm:$0xff]
    %v59 = vld [vmem:[#allocation5 + $0x70] sm:$0xff]
    %v60 = vld [vmem:[#allocation5 + $0x78] sm:$0xff]
    %v61 = vld [vmem:[#allocation8] sm:$0xff]
    %v62 = vld [vmem:[#allocation8 + $0x8] sm:$0xff]
    %v63 = vld [vmem:[#allocation8 + $0x10] sm:$0xff]
    %v64 = vld [vmem:[#allocation8 + $0x18] sm:$0xff]
    %v65 = vld [vmem:[#allocation8 + $0x20] sm:$0xff]
    %v66 = vld [vmem:[#allocation8 + $0x28] sm:$0xff]
    %v67 = vld [vmem:[#allocation8 + $0x30] sm:$0xff]
    %v68 = vld [vmem:[#allocation8 + $0x38] sm:$0xff]
    %v69 = vld [vmem:[#allocation8 + $0x40] sm:$0xff]
    %v70 = vld [vmem:[#allocation8 + $0x48] sm:$0xff]
    %v71 = vld [vmem:[#allocation8 + $0x50] sm:$0xff]
    %v72 = vld [vmem:[#allocation8 + $0x58] sm:$0xff]
    %v73 = vld [vmem:[#allocation8 + $0x60] sm:$0xff]
    %v74 = vld [vmem:[#allocation8 + $0x68] sm:$0xff]
    %v75 = vld [vmem:[#allocation8 + $0x70] sm:$0xff]
    %v76 = vld [vmem:[#allocation8 + $0x78] sm:$0xff]
    %77 = vmatprep.subr.mxu0 0.0
    %78 = vmatpush1.msra.mxu0 %v61
    %79 = vmatprep.subr.mxu0 0.0
    %80 = vmatpush1.msra.mxu0 %v62
    %81 = vmatprep.subr.mxu0 0.0
    %82 = vmatpush1.msra.mxu0 %v63
    %83 = vmatprep.subr.mxu0 0.0
    %84 = vmatpush1.msra.mxu0 %v64
    %85 = vmatprep.subr.mxu0 0.0
    %86 = vmatpush1.msra.mxu0 %v65
    %87 = vmatprep.subr.mxu0 0.0
    %88 = vmatpush1.msra.mxu0 %v66
    %89 = vmatprep.subr.mxu0 0.0
    %90 = vmatpush1.msra.mxu0 %v67
    %91 = vmatprep.subr.mxu0 0.0
    %92 = vmatpush1.msra.mxu0 %v68
    %93 = vmatprep.subr.mxu0 0.0
    %94 = vmatpush1.msra.mxu0 %v69
    %95 = vmatprep.subr.mxu0 0.0
    %96 = vmatpush1.msra.mxu0 %v70
    %97 = vmatprep.subr.mxu0 0.0
    %98 = vmatpush1.msra.mxu0 %v71
    %99 = vmatprep.subr.mxu0 0.0
    %100 = vmatpush1.msra.mxu0 %v72
    %101 = vmatprep.subr.mxu0 0.0
    %102 = vmatpush1.msra.mxu0 %v73
    %103 = vmatprep.subr.mxu0 0.0
    %104 = vmatpush1.msra.mxu0 %v74
    %105 = vmatprep.subr.mxu0 0.0
    %106 = vmatpush1.msra.mxu0 %v75
    %107 = vmatprep.subr.mxu0 0.0
    %108 = vmatpush1.msra.mxu0 %v76
    %109 = vmatprep.subr.mxu0 0.0
    %110 = vmatpush1.msra.mxu0 0.0
    %111 = vmatprep.subr.mxu0 0.0
    %112 = vmatpush1.msra.mxu0 0.0
    %113 = vmatprep.subr.mxu0 0.0
    %114 = vmatpush1.msra.mxu0 0.0
    %115 = vmatprep.subr.mxu0 0.0
    %116 = vmatpush1.msra.mxu0 0.0
    %117 = vmatprep.subr.mxu0 0.0
    %118 = vmatpush1.msra.mxu0 0.0
    %119 = vmatprep.subr.mxu0 0.0
    %120 = vmatpush1.msra.mxu0 0.0
    %121 = vmatprep.subr.mxu0 0.0
    %122 = vmatpush1.msra.mxu0 0.0
    %123 = vmatprep.subr.mxu0 0.0
    %124 = vmatpush1.msra.mxu0 0.0
    %125 = vmatprep.subr.mxu0 0.0
    %126 = vmatpush1.msra.mxu0 0.0
    %127 = vmatprep.subr.mxu0 0.0
    %128 = vmatpush1.msra.mxu0 0.0
    %129 = vmatprep.subr.mxu0 0.0
    %130 = vmatpush1.msra.mxu0 0.0
    %131 = vmatprep.subr.mxu0 0.0
    %132 = vmatpush1.msra.mxu0 0.0
    %133 = vmatprep.subr.mxu0 0.0
    %134 = vmatpush1.msra.mxu0 0.0
    %135 = vmatprep.subr.mxu0 0.0
    %136 = vmatpush1.msra.mxu0 0.0
    %137 = vmatprep.subr.mxu0 0.0
    %138 = vmatpush1.msra.mxu0 0.0
    %139 = vmatprep.subr.mxu0 0.0
    %140 = vmatpush1.msra.mxu0 0.0
    %141 = vmatprep.mubr.f32.mxu0 0.0
    %142 = vmatmul.mubr.f32.gmra.mrb[0].mxu0 %v45
    %v143 = vpop.f32.mrb[0].mxu0
    %v144 = vadd.f32 0.0, %v143
    %v145 = vpop.f32.mrb[0].mxu0
    %146 = vmatprep.mubr.f32.mxu0 0.0
    %147 = vmatmul.mubr.f32.gmra.mrb[0].mxu0 %v46
    %v148 = vpop.f32.mrb[0].mxu0
    %v149 = vadd.f32 0.0, %v148
    %v150 = vpop.f32.mrb[0].mxu0
    %151 = vmatprep.mubr.f32.mxu0 0.0
    %152 = vmatmul.mubr.f32.gmra.mrb[0].mxu0 %v47
    %v153 = vpop.f32.mrb[0].mxu0
    %v154 = vadd.f32 0.0, %v153
    %v155 = vpop.f32.mrb[0].mxu0
    %156 = vmatprep.mubr.f32.mxu0 0.0
    %157 = vmatmul.mubr.f32.gmra.mrb[0].mxu0 %v48
    %v158 = vpop.f32.mrb[0].mxu0
    %v159 = vadd.f32 0.0, %v158
    %v160 = vpop.f32.mrb[0].mxu0
    %161 = vmatprep.mubr.f32.mxu0 0.0
    %162 = vmatmul.mubr.f32.gmra.mrb[0].mxu0 %v49
    %v163 = vpop.f32.mrb[0].mxu0
    %v164 = vadd.f32 0.0, %v163
    %v165 = vpop.f32.mrb[0].mxu0
    %166 = vmatprep.mubr.f32.mxu0 0.0
    %167 = vmatmul.mubr.f32.gmra.mrb[0].mxu0 %v50
    %v168 = vpop.f32.mrb[0].mxu0
    %v169 = vadd.f32 0.0, %v168
    %v170 = vpop.f32.mrb[0].mxu0
    %171 = vmatprep.mubr.f32.mxu0 0.0
    %172 = vmatmul.mubr.f32.gmra.mrb[0].mxu0 %v51
    %v173 = vpop.f32.mrb[0].mxu0
    %v174 = vadd.f32 0.0, %v173
    %v175 = vpop.f32.mrb[0].mxu0
    %176 = vmatprep.mubr.f32.mxu0 0.0
    %177 = vmatmul.mubr.f32.gmra.mrb[0].mxu0 %v52
    %v178 = vpop.f32.mrb[0].mxu0
    %v179 = vadd.f32 0.0, %v178
    %v180 = vpop.f32.mrb[0].mxu0
    %181 = vmatprep.mubr.f32.mxu0 0.0
    %182 = vmatmul.mubr.f32.gmra.mrb[0].mxu0 %v53
    %v183 = vpop.f32.mrb[0].mxu0
    %v184 = vadd.f32 0.0, %v183
    %v185 = vpop.f32.mrb[0].mxu0
    %186 = vmatprep.mubr.f32.mxu0 0.0
    %187 = vmatmul.mubr.f32.gmra.mrb[0].mxu0 %v54
    %v188 = vpop.f32.mrb[0].mxu0
    %v189 = vadd.f32 0.0, %v188
    %v190 = vpop.f32.mrb[0].mxu0
    %191 = vmatprep.mubr.f32.mxu0 0.0
    %192 = vmatmul.mubr.f32.gmra.mrb[0].mxu0 %v55
    %v193 = vpop.f32.mrb[0].mxu0
    %v194 = vadd.f32 0.0, %v193
    %v195 = vpop.f32.mrb[0].mxu0
    %196 = vmatprep.mubr.f32.mxu0 0.0
    %197 = vmatmul.mubr.f32.gmra.mrb[0].mxu0 %v56
    %v198 = vpop.f32.mrb[0].mxu0
    %v199 = vadd.f32 0.0, %v198
    %v200 = vpop.f32.mrb[0].mxu0
    %201 = vmatprep.mubr.f32.mxu0 0.0
    %202 = vmatmul.mubr.f32.gmra.mrb[0].mxu0 %v57
    %v203 = vpop.f32.mrb[0].mxu0
    %v204 = vadd.f32 0.0, %v203
    %v205 = vpop.f32.mrb[0].mxu0
    %206 = vmatprep.mubr.f32.mxu0 0.0
    %207 = vmatmul.mubr.f32.gmra.mrb[0].mxu0 %v58
    %v208 = vpop.f32.mrb[0].mxu0
    %v209 = vadd.f32 0.0, %v208
    %v210 = vpop.f32.mrb[0].mxu0
    %211 = vmatprep.mubr.f32.mxu0 0.0
    %212 = vmatmul.mubr.f32.gmra.mrb[0].mxu0 %v59
    %v213 = vpop.f32.mrb[0].mxu0
    %v214 = vadd.f32 0.0, %v213
    %v215 = vpop.f32.mrb[0].mxu0
    %216 = vmatprep.mubr.f32.mxu0 0.0
    %217 = vmatmul.mubr.f32.gmra.mrb[0].mxu0 %v60
    %v218 = vpop.f32.mrb[0].mxu0
    %v219 = vadd.f32 0.0, %v218
    %v220 = vpop.f32.mrb[0].mxu0
    %221 = vdwg.mxu0
    %p222 = scmp.eq.s32.totalorder 0, 0
    // Predicated region
    $region18: #{tpu_custom_call.1} parent=1 // pred_check
      %p223 = pneg %p222
    $region19: #{tpu_custom_call.1} parent=1 // pred_check_branch
      %225 = sbr.rel (%p223) target = $region21
    $region20: #{tpu_custom_call.1} parent=1 // pred_region
      %226 = vst [vmem:[#allocation2] sm:$0xff] %v144
      %227 = vst [vmem:[#allocation2 + $0x8] sm:$0xff] %v149
      %228 = vst [vmem:[#allocation2 + $0x10] sm:$0xff] %v154
      %229 = vst [vmem:[#allocation2 + $0x18] sm:$0xff] %v159
      %230 = vst [vmem:[#allocation2 + $0x20] sm:$0xff] %v164
      %231 = vst [vmem:[#allocation2 + $0x28] sm:$0xff] %v169
      %232 = vst [vmem:[#allocation2 + $0x30] sm:$0xff] %v174
      %233 = vst [vmem:[#allocation2 + $0x38] sm:$0xff] %v179
      %234 = vst [vmem:[#allocation2 + $0x40] sm:$0xff] %v184
      %235 = vst [vmem:[#allocation2 + $0x48] sm:$0xff] %v189
      %236 = vst [vmem:[#allocation2 + $0x50] sm:$0xff] %v194
      %237 = vst [vmem:[#allocation2 + $0x58] sm:$0xff] %v199
      %238 = vst [vmem:[#allocation2 + $0x60] sm:$0xff] %v204
      %239 = vst [vmem:[#allocation2 + $0x68] sm:$0xff] %v209
      %240 = vst [vmem:[#allocation2 + $0x70] sm:$0xff] %v214
      %241 = vst [vmem:[#allocation2 + $0x78] sm:$0xff] %v219
    $region21: #{tpu_custom_call.1} parent=1 // pred_fallthru
      _
    %p242 = scmp.ne.s32.totalorder 0, 0
    // Predicated region
    $region22: #{tpu_custom_call.1} parent=1 // pred_check
      %p243 = pneg %p242
    $region23: #{tpu_custom_call.1} parent=1 // pred_check_branch
      %245 = sbr.rel (%p243) target = $region25
    $region24: #{tpu_custom_call.1} parent=1 // pred_region
      %v246 = vld [vmem:[#allocation2] sm:$0xff]
      %v247 = vld [vmem:[#allocation2 + $0x8] sm:$0xff]
      %v248 = vld [vmem:[#allocation2 + $0x10] sm:$0xff]
      %v249 = vld [vmem:[#allocation2 + $0x18] sm:$0xff]
      %v250 = vld [vmem:[#allocation2 + $0x20] sm:$0xff]
      %v251 = vld [vmem:[#allocation2 + $0x28] sm:$0xff]
      %v252 = vld [vmem:[#allocation2 + $0x30] sm:$0xff]
      %v253 = vld [vmem:[#allocation2 + $0x38] sm:$0xff]
      %v254 = vld [vmem:[#allocation2 + $0x40] sm:$0xff]
      %v255 = vld [vmem:[#allocation2 + $0x48] sm:$0xff]
      %v256 = vld [vmem:[#allocation2 + $0x50] sm:$0xff]
      %v257 = vld [vmem:[#allocation2 + $0x58] sm:$0xff]
      %v258 = vld [vmem:[#allocation2 + $0x60] sm:$0xff]
      %v259 = vld [vmem:[#allocation2 + $0x68] sm:$0xff]
      %v260 = vld [vmem:[#allocation2 + $0x70] sm:$0xff]
      %v261 = vld [vmem:[#allocation2 + $0x78] sm:$0xff]
      %v262 = vadd.f32 %v246, %v144
      %v263 = vadd.f32 %v247, %v149
      %v264 = vadd.f32 %v248, %v154
      %v265 = vadd.f32 %v249, %v159
      %v266 = vadd.f32 %v250, %v164
      %v267 = vadd.f32 %v251, %v169
      %v268 = vadd.f32 %v252, %v174
      %v269 = vadd.f32 %v253, %v179
      %v270 = vadd.f32 %v254, %v184
      %v271 = vadd.f32 %v255, %v189
      %v272 = vadd.f32 %v256, %v194
      %v273 = vadd.f32 %v257, %v199
      %v274 = vadd.f32 %v258, %v204
      %v275 = vadd.f32 %v259, %v209
      %v276 = vadd.f32 %v260, %v214
      %v277 = vadd.f32 %v261, %v219
      %278 = vst [vmem:[#allocation2] sm:$0xff] %v262
      %279 = vst [vmem:[#allocation2 + $0x8] sm:$0xff] %v263
      %280 = vst [vmem:[#allocation2 + $0x10] sm:$0xff] %v264
      %281 = vst [vmem:[#allocation2 + $0x18] sm:$0xff] %v265
      %282 = vst [vmem:[#allocation2 + $0x20] sm:$0xff] %v266
      %283 = vst [vmem:[#allocation2 + $0x28] sm:$0xff] %v267
      %284 = vst [vmem:[#allocation2 + $0x30] sm:$0xff] %v268
      %285 = vst [vmem:[#allocation2 + $0x38] sm:$0xff] %v269
      %286 = vst [vmem:[#allocation2 + $0x40] sm:$0xff] %v270
      %287 = vst [vmem:[#allocation2 + $0x48] sm:$0xff] %v271
      %288 = vst [vmem:[#allocation2 + $0x50] sm:$0xff] %v272
      %289 = vst [vmem:[#allocation2 + $0x58] sm:$0xff] %v273
      %290 = vst [vmem:[#allocation2 + $0x60] sm:$0xff] %v274
      %291 = vst [vmem:[#allocation2 + $0x68] sm:$0xff] %v275
      %292 = vst [vmem:[#allocation2 + $0x70] sm:$0xff] %v276
      %293 = vst [vmem:[#allocation2 + $0x78] sm:$0xff] %v277
    $region25: #{tpu_custom_call.1} parent=1 // pred_fallthru
      _
    // Predicated region
    $region26: #{tpu_custom_call.1} parent=1 // pred_check
      %p294 = pneg %p222
    $region27: #{tpu_custom_call.1} parent=1 // pred_check_branch
      %296 = sbr.rel (%p294) target = $region29
    $region28: #{tpu_custom_call.1} parent=1 // pred_region
      %v297 = vld [vmem:[#allocation2] sm:$0xff]
      %v298 = vld [vmem:[#allocation2 + $0x8] sm:$0xff]
      %v299 = vld [vmem:[#allocation2 + $0x10] sm:$0xff]
      %v300 = vld [vmem:[#allocation2 + $0x18] sm:$0xff]
      %v301 = vld [vmem:[#allocation2 + $0x20] sm:$0xff]
      %v302 = vld [vmem:[#allocation2 + $0x28] sm:$0xff]
      %v303 = vld [vmem:[#allocation2 + $0x30] sm:$0xff]
      %v304 = vld [vmem:[#allocation2 + $0x38] sm:$0xff]
      %v305 = vld [vmem:[#allocation2 + $0x40] sm:$0xff]
      %v306 = vld [vmem:[#allocation2 + $0x48] sm:$0xff]
      %v307 = vld [vmem:[#allocation2 + $0x50] sm:$0xff]
      %v308 = vld [vmem:[#allocation2 + $0x58] sm:$0xff]
      %v309 = vld [vmem:[#allocation2 + $0x60] sm:$0xff]
      %v310 = vld [vmem:[#allocation2 + $0x68] sm:$0xff]
      %v311 = vld [vmem:[#allocation2 + $0x70] sm:$0xff]
      %v312 = vld [vmem:[#allocation2 + $0x78] sm:$0xff]
      %313 = vst [vmem:[#allocation10] sm:$0xff] %v297
      %314 = vst [vmem:[#allocation10 + $0x8] sm:$0xff] %v298
      %315 = vst [vmem:[#allocation10 + $0x10] sm:$0xff] %v299
      %316 = vst [vmem:[#allocation10 + $0x18] sm:$0xff] %v300
      %317 = vst [vmem:[#allocation10 + $0x20] sm:$0xff] %v301
      %318 = vst [vmem:[#allocation10 + $0x28] sm:$0xff] %v302
      %319 = vst [vmem:[#allocation10 + $0x30] sm:$0xff] %v303
      %320 = vst [vmem:[#allocation10 + $0x38] sm:$0xff] %v304
      %321 = vst [vmem:[#allocation10 + $0x40] sm:$0xff] %v305
      %322 = vst [vmem:[#allocation10 + $0x48] sm:$0xff] %v306
      %323 = vst [vmem:[#allocation10 + $0x50] sm:$0xff] %v307
      %324 = vst [vmem:[#allocation10 + $0x58] sm:$0xff] %v308
      %325 = vst [vmem:[#allocation10 + $0x60] sm:$0xff] %v309
      %326 = vst [vmem:[#allocation10 + $0x68] sm:$0xff] %v310
      %327 = vst [vmem:[#allocation10 + $0x70] sm:$0xff] %v311
      %328 = vst [vmem:[#allocation10 + $0x78] sm:$0xff] %v312
    $region29: #{tpu_custom_call.1} parent=1 // pred_fallthru
      _
    // Predicated region
    $region30: #{tpu_custom_call.1} parent=1 // pred_check
      _
    $region31: #{tpu_custom_call.1} parent=1 // pred_check_branch
      %330 = sbr.rel (0) target = $region33
    $region32: #{tpu_custom_call.1} parent=1 // pred_region
      %s332 = ssub.s32 2048, 2048
      %333 = vsyncadd [#allocation7], %s332
      %s334 = sshll.u32 [#allocation10], 4
      %s335 = int_to_ptr.vmem [resolvable:$true] %s334
      %340 = dma.vmem_to_hbm [thread:$0]  %s335, 2048, %s3, [#allocation7], 128, 128, 8
    $region33: #{tpu_custom_call.1} parent=1 // pred_fallthru
      _
    // Predicated region
    $region34: #{tpu_custom_call.1} parent=1 // pred_check
      _
    $region35: #{tpu_custom_call.1} parent=1 // pred_check_branch
      %342 = sbr.rel (0) target = $region37
    $region36: #{tpu_custom_call.1} parent=1 // pred_region
      %343 = dma.done [#allocation7], 2048
    $region37: #{tpu_custom_call.1} parent=1 // pred_fallthru
      _
    %344 = vsyncpa [#allocation6], 1
    %345 = vsyncpa [#allocation9], 1
    %346 = vsyncpa [#allocation7], 1

</llo_original>
